<compile_context>
chip_gen: v5e
topology: v5e:2x2
jax: 0.10.0
libtpu: 0.0.40
codegen_flags: <defaults>
</compile_context>

<pallas_src>
import jax
import jax.numpy as jnp
from jax import lax
from jax.experimental import pallas as pl
from jax.experimental.pallas import tpu as pltpu


# ---------------------------------------------------------------------------
# Static helpers (all arguments are Python ints at trace time).
# ---------------------------------------------------------------------------
def _batch_chunk(tb, s, h):
    """Rows per inner compute chunk: ~<=1 MiB of f32 working set, a multiple of 8
    that divides tb (else fall back to a single chunk)."""
    target = max(8, (1 << 20) // max(s * h * 4, 1))
    if target >= tb:
        return tb
    best = tb
    for c in range(8, tb, 8):
        if c > target:
            break
        if tb % c == 0:
            best = c
    return best


def _vmem_capacity_bytes():
    """Physical per-core VMEM (generation-aware); conservative fallback = v7x 64 MiB."""
    cap = 64 * 1024 * 1024
    try:
        info = pltpu.get_tpu_info()
        cap = int(getattr(info, "vmem_capacity_bytes", cap))
    except Exception:
        pass
    return cap


def _choose_block_batch(B, S, H, itemsize, budget):
    """Batch rows per grid step. Honors the (8,128) rule on the (tb, H) output block
    (tb multiple of 8 or tb == B), prefers tb | B, and keeps >=4 grid steps when B
    is large enough so v7x's two TensorCores can split the parallel batch axis."""
    # Per-row bytes resident per pipeline step: double-buffered input block,
    # double-buffered f32 output row, small per-row (S,) softmax values.
    row = 2 * S * H * itemsize + 2 * H * 4 + 4 * S * 4
    tb = min(B, max(1, budget // max(row, 1)))
    if B >= 32:
        tb = min(tb, max(8, (B // 4 // 8) * 8))   # aim for >= ~4 grid steps
    if tb >= B:
        return B
    tb = max(8, (tb // 8) * 8)                    # (8,128) rule on (tb, H) output block
    if tb >= B:
        return B
    for cand in range(tb, 7, -8):                 # prefer tb | B (no ragged last block)
        if B % cand == 0:
            return cand
    return tb


# ---------------------------------------------------------------------------
# Kernel
# ---------------------------------------------------------------------------
def _process_rows(x_ref, o_ref, off, rows, gw3, sgw, gamma, beta):
    """Full attention forward for `rows` batch rows starting at sublane offset `off`."""
    xc = x_ref[pl.ds(off, rows), :, :].astype(jnp.float32)        # (R, S, H)
    h = xc.shape[-1]
    inv_h = jnp.float32(1.0 / h)

    # Fused LayerNorm statistics + fused (gamma*w) score projection, one pass over H.
    s1 = jnp.sum(xc, axis=-1)                                     # (R, S)
    s2 = jnp.sum(xc * xc, axis=-1)                                # (R, S)
    sg = jnp.sum(xc * gw3, axis=-1)                               # (R, S)  sum_h(x * gamma*w)
    mean = s1 * inv_h
    var = jnp.maximum(s2 * inv_h - mean * mean, 0.0)              # guard tiny negatives
    istd = lax.rsqrt(var + 1e-5)
    # score = istd*(sum(x*gw) - mean*sum(gw)); constant sum(beta*w) cancels below.
    scores = istd * (sg - mean * sgw)                             # (R, S), lane-dense

    # Softmax over seq (after the shift the row max is 0; upper clamp is dead).
    scores = scores - jnp.max(scores, axis=-1, keepdims=True)
    scores = jnp.maximum(scores, -10.0)
    e = jnp.exp(scores)                                           # (R, S)
    denom = jnp.sum(e, axis=-1, keepdims=True)                    # (R, 1)

    # Dropout(p=0.1) on the weights is identity in eval mode.
    # TODO(synk): training-mode dropout (pltpu.prng_seed + stateful_bernoulli, /0.9).

    # attended = gamma*(sum_s coef_s*x_s - sum_s coef_s*mean_s)/denom + beta,
    # with coef_s = e_s*istd_s; softmax weights sum to 1 so the beta term is exact.
    coef = e * istd                                               # (R, S)
    msum = jnp.sum(coef * mean, axis=-1, keepdims=True)           # (R, 1)
    acc = jnp.sum(coef[:, :, None] * xc, axis=1)                  # (R, H)
    inv_denom = pl.reciprocal(denom, approx=True)                 # EUP slot, ~free
    out = gamma * ((acc - msum) * inv_denom) + beta               # (R, H)
    o_ref[pl.ds(off, rows), :] = out.astype(o_ref.dtype)


def attention_kernel(x_ref, gw_ref, gamma_ref, beta_ref, o_ref):
    # x_ref block: (TB, S, H) streamed input; gw/gamma/beta: (1, H); o_ref: (TB, H).
    tb, s, h = x_ref.shape
    rows = _batch_chunk(tb, s, h)
    n_chunks = tb // rows

    # Hoisted once per grid step (broadcasts are not CSE'd inside loops).
    gw3 = gw_ref[...].astype(jnp.float32).reshape(1, 1, h)        # gamma * w
    sgw = jnp.sum(gw_ref[...].astype(jnp.float32), axis=-1, keepdims=True)  # (1, 1)
    gamma = gamma_ref[...].astype(jnp.float32)                    # (1, H)
    beta = beta_ref[...].astype(jnp.float32)                      # (1, H)

    if n_chunks == 1:
        _process_rows(x_ref, o_ref, 0, tb, gw3, sgw, gamma, beta)
    else:
        def body(ci, carry):
            off = pl.multiple_of(ci * rows, rows)
            _process_rows(x_ref, o_ref, off, rows, gw3, sgw, gamma, beta)
            return carry
        lax.fori_loop(0, n_chunks, body, 0)


# ---------------------------------------------------------------------------
# Wrapper
# ---------------------------------------------------------------------------
def attention_forward(x, w, gamma, beta):
    """x: (B, S, H) lstm_output; w: (1, H) Linear(H,1,bias=False) weight;
    gamma/beta: (1, H) LayerNorm affine. Returns (B, H) float32 (eval forward)."""
    B, S, H = x.shape
    itemsize = jnp.dtype(x.dtype).itemsize
    cap = _vmem_capacity_bytes()
    budget = max(8 * 1024 * 1024, cap // 4)       # ~25% of physical VMEM for the x tile
    tb = _choose_block_batch(B, S, H, itemsize, budget)
    grid = (pl.cdiv(B, tb),)

    # Tiny (1, H) parameter fold for the fused score projection (not a big-tensor
    # wrapper pre-scale); sum(beta*w) cancels under the seq-max shift in-kernel.
    gw = gamma.astype(jnp.float32) * w.astype(jnp.float32)

    # Raise the scoped-VMEM limit only when the tile actually needs it, capped at
    # 3/4 of this generation's physical VMEM.
    rows = _batch_chunk(tb, S, H)
    est = (2 * tb * S * H * itemsize + 2 * tb * H * 4   # pipelined input + output
           + 3 * rows * S * H * 4 + 4 * tb * S * 4)     # chunk f32 working set + softmax vals
    vmem_limit = None
    if est > 12 * 1024 * 1024:
        vmem_limit = min(cap * 3 // 4, max(32 * 1024 * 1024, est + (8 << 20)))

    # TODO(synk): H not a multiple of 128 gives lane-masked stores; for production
    # shapes pad H upstream (with masked LayerNorm stats) if that matters. For very
    # large per-row S*H that cannot fit 8 rows in VMEM, an S-axis grid split would be
    # needed (left out because the post-max clamp breaks online-softmax rescaling).
    return pl.pallas_call(
        attention_kernel,
        out_shape=jax.ShapeDtypeStruct((B, H), jnp.float32),
        grid_spec=pltpu.PrefetchScalarGridSpec(
            num_scalar_prefetch=0,
            grid=grid,
            in_specs=[
                pl.BlockSpec((tb, S, H), lambda b: (b, 0, 0)),   # lstm_output slab
                pl.BlockSpec((1, H), lambda b: (0, 0)),          # gamma * w
                pl.BlockSpec((1, H), lambda b: (0, 0)),          # layernorm gamma
                pl.BlockSpec((1, H), lambda b: (0, 0)),          # layernorm beta
            ],
            out_specs=pl.BlockSpec((tb, H), lambda b: (b, 0)),
        ),
        compiler_params=pltpu.CompilerParams(
            dimension_semantics=("parallel",),
            vmem_limit_bytes=vmem_limit,
        ),
    )(x, gw, gamma, beta)


# ---------------------------------------------------------------------------
# Pure-JAX reference (mirrors the PyTorch module in eval mode)
# ---------------------------------------------------------------------------
def attention_reference(x, w, gamma, beta):
    x = x.astype(jnp.float32)
    mean = jnp.mean(x, axis=-1, keepdims=True)
    var = jnp.mean(jnp.square(x - mean), axis=-1, keepdims=True)
    xn = (x - mean) * lax.rsqrt(var + 1e-5) * gamma[0] + beta[0]
    scores = jnp.einsum("bsh,h->bs", xn, w[0])
    scores = scores - jnp.max(scores, axis=1, keepdims=True)
    scores = jnp.clip(scores, -10.0, 10.0)
    weights = jax.nn.softmax(scores, axis=1)
    return jnp.sum(weights[..., None] * xn, axis=1)


if __name__ == "__main__":
    B, S, H = 2, 8, 32
    key = jax.random.PRNGKey(0)
    kx, kw, kg, kb = jax.random.split(key, 4)

    x = jax.random.normal(kx, (B, S, H), dtype=jnp.float32)           # lstm_output
    w = jax.random.normal(kw, (1, H), dtype=jnp.float32) * (1.0 / jnp.sqrt(H))
    gamma = 1.0 + 0.1 * jax.random.normal(kg, (1, H), dtype=jnp.float32)
    beta = 0.1 * jax.random.normal(kb, (1, H), dtype=jnp.float32)

    out = attention_forward(x, w, gamma, beta)
    jax.block_until_ready(out)

    ref = attention_reference(x, w, gamma, beta)
    assert out.shape == (B, H)
    # Remaining deltas: fused-variance reduction order and the approximate EUP
    # reciprocal on the softmax denominator (~2e-4 relative).
    assert jnp.allclose(out, ref, atol=5e-3, rtol=5e-3), "mismatch vs reference"

    print("KERNEL_OK")
</pallas_src>

<mosaic_0001>
module attributes {stable_mosaic.version = 11 : i64} {
  func.func @attention_kernel(%arg0: i32, %arg1: memref<2x8x32xf32, #tpu.memory_space<vmem>>, %arg2: memref<1x32xf32, #tpu.memory_space<vmem>>, %arg3: memref<1x32xf32, #tpu.memory_space<vmem>>, %arg4: memref<1x32xf32, #tpu.memory_space<vmem>>, %arg5: memref<2x32xf32, #tpu.memory_space<vmem>>) attributes {dimension_semantics = [#tpu.dimension_semantics<parallel>], iteration_bounds = array<i64: 1>, scalar_prefetch = 0 : i64, scratch_operands = 0 : i64, tpu.core_type = #tpu.core_type<tc>, window_params = [{transform_indices = @transform_0, window_bounds = array<i64: 2, 8, 32>}, {pipeline_mode = #tpu.pipeline_mode<synchronous>, transform_indices = @transform_1, window_bounds = array<i64: 1, 32>}, {pipeline_mode = #tpu.pipeline_mode<synchronous>, transform_indices = @transform_2, window_bounds = array<i64: 1, 32>}, {pipeline_mode = #tpu.pipeline_mode<synchronous>, transform_indices = @transform_3, window_bounds = array<i64: 1, 32>}, {transform_indices = @transform_4, window_bounds = array<i64: 2, 32>}]} {
    %c0 = arith.constant 0 : index
    %c0_0 = arith.constant 0 : index
    %0 = vector.load %arg2[%c0, %c0_0] : memref<1x32xf32, #tpu.memory_space<vmem>>, vector<1x32xf32>
    %1 = vector.shape_cast %0 : vector<1x32xf32> to vector<1x1x32xf32>
    %c0_1 = arith.constant 0 : index
    %c0_2 = arith.constant 0 : index
    %2 = vector.load %arg2[%c0_1, %c0_2] : memref<1x32xf32, #tpu.memory_space<vmem>>, vector<1x32xf32>
    %cst = arith.constant dense<0.000000e+00> : vector<1xf32>
    %3 = vector.multi_reduction <add>, %2, %cst [1] : vector<1x32xf32> to vector<1xf32>
    %4 = vector.shape_cast %3 : vector<1xf32> to vector<1x1xf32>
    %c0_3 = arith.constant 0 : index
    %c0_4 = arith.constant 0 : index
    %5 = vector.load %arg3[%c0_3, %c0_4] : memref<1x32xf32, #tpu.memory_space<vmem>>, vector<1x32xf32>
    %c0_5 = arith.constant 0 : index
    %c0_6 = arith.constant 0 : index
    %6 = vector.load %arg4[%c0_5, %c0_6] : memref<1x32xf32, #tpu.memory_space<vmem>>, vector<1x32xf32>
    %c0_7 = arith.constant 0 : index
    %c0_8 = arith.constant 0 : index
    %c0_9 = arith.constant 0 : index
    %7 = vector.load %arg1[%c0_7, %c0_8, %c0_9] : memref<2x8x32xf32, #tpu.memory_space<vmem>>, vector<2x8x32xf32>
    %cst_10 = arith.constant dense<0.000000e+00> : vector<2x8xf32>
    %8 = vector.multi_reduction <add>, %7, %cst_10 [2] : vector<2x8x32xf32> to vector<2x8xf32>
    %9 = arith.mulf %7, %7 : vector<2x8x32xf32>
    %cst_11 = arith.constant dense<0.000000e+00> : vector<2x8xf32>
    %10 = vector.multi_reduction <add>, %9, %cst_11 [2] : vector<2x8x32xf32> to vector<2x8xf32>
    %11 = vector.broadcast %1 : vector<1x1x32xf32> to vector<2x8x32xf32>
    %12 = arith.mulf %7, %11 : vector<2x8x32xf32>
    %cst_12 = arith.constant dense<0.000000e+00> : vector<2x8xf32>
    %13 = vector.multi_reduction <add>, %12, %cst_12 [2] : vector<2x8x32xf32> to vector<2x8xf32>
    %cst_13 = arith.constant 3.125000e-02 : f32
    %14 = vector.broadcast %cst_13 : f32 to vector<2x8xf32>
    %15 = arith.mulf %8, %14 : vector<2x8xf32>
    %cst_14 = arith.constant 3.125000e-02 : f32
    %16 = vector.broadcast %cst_14 : f32 to vector<2x8xf32>
    %17 = arith.mulf %10, %16 : vector<2x8xf32>
    %18 = arith.mulf %15, %15 : vector<2x8xf32>
    %19 = arith.subf %17, %18 : vector<2x8xf32>
    %cst_15 = arith.constant 0.000000e+00 : f32
    %20 = vector.broadcast %cst_15 : f32 to vector<2x8xf32>
    %21 = arith.maximumf %19, %20 : vector<2x8xf32>
    %cst_16 = arith.constant 9.99999974E-6 : f32
    %22 = vector.broadcast %cst_16 : f32 to vector<2x8xf32>
    %23 = arith.addf %21, %22 : vector<2x8xf32>
    %24 = math.rsqrt %23 : vector<2x8xf32>
    %25 = vector.broadcast %4 : vector<1x1xf32> to vector<2x8xf32>
    %26 = arith.mulf %15, %25 : vector<2x8xf32>
    %27 = arith.subf %13, %26 : vector<2x8xf32>
    %28 = arith.mulf %24, %27 : vector<2x8xf32>
    %cst_17 = arith.constant dense<0xFF800000> : vector<2xf32>
    %29 = vector.multi_reduction <maximumf>, %28, %cst_17 [1] : vector<2x8xf32> to vector<2xf32>
    %30 = vector.shape_cast %29 : vector<2xf32> to vector<2x1xf32>
    %31 = vector.broadcast %30 : vector<2x1xf32> to vector<2x8xf32>
    %32 = arith.subf %28, %31 : vector<2x8xf32>
    %cst_18 = arith.constant -1.000000e+01 : f32
    %33 = vector.broadcast %cst_18 : f32 to vector<2x8xf32>
    %34 = arith.maximumf %32, %33 : vector<2x8xf32>
    %35 = math.exp %34 : vector<2x8xf32>
    %cst_19 = arith.constant dense<0.000000e+00> : vector<2xf32>
    %36 = vector.multi_reduction <add>, %35, %cst_19 [1] : vector<2x8xf32> to vector<2xf32>
    %37 = vector.shape_cast %36 : vector<2xf32> to vector<2x1xf32>
    %38 = arith.mulf %35, %24 : vector<2x8xf32>
    %39 = arith.mulf %38, %15 : vector<2x8xf32>
    %cst_20 = arith.constant dense<0.000000e+00> : vector<2xf32>
    %40 = vector.multi_reduction <add>, %39, %cst_20 [1] : vector<2x8xf32> to vector<2xf32>
    %41 = vector.shape_cast %40 : vector<2xf32> to vector<2x1xf32>
    %42 = vector.shape_cast %38 : vector<2x8xf32> to vector<2x8x1xf32>
    %43 = vector.broadcast %42 : vector<2x8x1xf32> to vector<2x8x32xf32>
    %44 = arith.mulf %43, %7 : vector<2x8x32xf32>
    %cst_21 = arith.constant dense<0.000000e+00> : vector<2x32xf32>
    %45 = vector.multi_reduction <add>, %44, %cst_21 [1] : vector<2x8x32xf32> to vector<2x32xf32>
    %46 = tpu.reciprocal %37 {approx = true} : vector<2x1xf32> -> vector<2x1xf32>
    %47 = vector.broadcast %41 : vector<2x1xf32> to vector<2x32xf32>
    %48 = arith.subf %45, %47 : vector<2x32xf32>
    %49 = vector.broadcast %46 : vector<2x1xf32> to vector<2x32xf32>
    %50 = arith.mulf %48, %49 : vector<2x32xf32>
    %51 = vector.broadcast %5 : vector<1x32xf32> to vector<2x32xf32>
    %52 = arith.mulf %51, %50 : vector<2x32xf32>
    %53 = vector.broadcast %6 : vector<1x32xf32> to vector<2x32xf32>
    %54 = arith.addf %52, %53 : vector<2x32xf32>
    %c0_22 = arith.constant 0 : index
    %c0_23 = arith.constant 0 : index
    %55 = vector.load %arg5[%c0_22, %c0_23] : memref<2x32xf32, #tpu.memory_space<vmem>>, vector<2x32xf32>
    tpu.vector_store %arg5[%c0_22, %c0_23], %54 {strides = array<i32>} : memref<2x32xf32, #tpu.memory_space<vmem>>, vector<2x32xf32>,
    return
  }
  func.func @transform_0(%arg0: i32) -> (i32, i32, i32) {
    %c0_i32 = arith.constant 0 : i32
    %c0_i32_0 = arith.constant 0 : i32
    %c0_i32_1 = arith.constant 0 : i32
    return %arg0, %c0_i32, %c0_i32_0 : i32, i32, i32
  }
  func.func @transform_1(%arg0: i32) -> (i32, i32) {
    %c0_i32 = arith.constant 0 : i32
    %c0_i32_0 = arith.constant 0 : i32
    %c0_i32_1 = arith.constant 0 : i32
    return %c0_i32, %c0_i32_0 : i32, i32
  }
  func.func @transform_2(%arg0: i32) -> (i32, i32) {
    %c0_i32 = arith.constant 0 : i32
    %c0_i32_0 = arith.constant 0 : i32
    %c0_i32_1 = arith.constant 0 : i32
    return %c0_i32, %c0_i32_0 : i32, i32
  }
  func.func @transform_3(%arg0: i32) -> (i32, i32) {
    %c0_i32 = arith.constant 0 : i32
    %c0_i32_0 = arith.constant 0 : i32
    %c0_i32_1 = arith.constant 0 : i32
    return %c0_i32, %c0_i32_0 : i32, i32
  }
  func.func @transform_4(%arg0: i32) -> (i32, i32) {
    %c0_i32 = arith.constant 0 : i32
    %c0_i32_0 = arith.constant 0 : i32
    return %arg0, %c0_i32 : i32, i32
  }
}

</mosaic_0001>

<llo_original>
// kernel: tpu_custom_call.1
$region0: #{tpu_custom_call.1}
  #allocation0 [shape = 'u32[]', space=smem, size = 0x4, offset = 0x4, fixed_abs, tag = 'smem constant byte address 0x4 - core index']
  #allocation1 [shape = 'u32[72,128]{1,0:T(1,128)}', space=vmem, size = 0x9000, scoped, tag = 'internal scratch']
  %s0 = inlined_call_operand.hbm [shape: f32[2,8,32], index: 0, kind: input, shape index: {}]
  %s1 = inlined_call_operand.hbm [shape: f32[1,32], index: 1, kind: input, shape index: {}]
  %s2 = inlined_call_operand.vmem [shape: f32[1,32], index: 2, kind: input, shape index: {}]
  %s3 = inlined_call_operand.vmem [shape: f32[1,32], index: 3, kind: input, shape index: {}]
  %s4 = inlined_call_operand.hbm [shape: f32[2,32], index: 4, kind: output, shape index: {}]
  %s5 = sld [smem:[#allocation0]]
  $region34: #{tpu_custom_call.1} parent=0
    _
  %s7 = ssub.s32 1, %s5
  %s8 = scalar_select 0, %s7, %s5
  $region1: #{tpu_custom_call.1} parent=0
    #allocation2 [shape = 'u8[8192]{0}', space=vmem, size = 0x2000, scoped, tag = 'input window, operand 0, single buffered']
    #allocation3 [shape = 's32[1]{0}', space=sflag, size = 0x4, scoped, tag = 'scoped memory for tpu_custom_call.1']
    #allocation4 [shape = 's32[1]{0}', space=sflag, size = 0x4, scoped, tag = 'scoped memory for tpu_custom_call.1']
    #allocation5 [shape = 'u8[512]{0}', space=vmem, size = 0x400, scoped, tag = 'input window, operand 1, single buffered']
    #allocation6 [shape = 's32[1]{0}', space=sflag, size = 0x4, scoped, tag = 'scoped memory for tpu_custom_call.1']
    #allocation7 [shape = 'u8[1024]{0}', space=vmem, size = 0x400, scoped, tag = 'output window, operand 0, single buffered']
    %9 = vsyncpa [#allocation3], 0
    %10 = vsyncpa [#allocation6], 0
    %11 = vsyncpa [#allocation4], 0
    // Predicated region
    $region2: #{tpu_custom_call.1} parent=1 // pred_check
      _
    $region3: #{tpu_custom_call.1} parent=1 // pred_check_branch
      %13 = sbr.rel (0) target = $region5
    $region4: #{tpu_custom_call.1} parent=1 // pred_region
      %15 = vsyncadd [#allocation3], 0
      %s16 = sshll.u32 %s0, 4
      %s17 = int_to_ptr.hbm [resolvable:$true] %s16
      %s18 = sshll.u32 [#allocation2], 4
      %s19 = int_to_ptr.vmem [resolvable:$true] %s18
      %24 = dma.hbm_to_vmem [thread:$0]  %s17, 256, %s19, [#allocation3], 128, 128, 8
    $region5: #{tpu_custom_call.1} parent=1 // pred_fallthru
      _
    // Predicated region
    $region6: #{tpu_custom_call.1} parent=1 // pred_check
      _
    $region7: #{tpu_custom_call.1} parent=1 // pred_check_branch
      %26 = sbr.rel (0) target = $region9
    $region8: #{tpu_custom_call.1} parent=1 // pred_region
      %28 = vsyncadd [#allocation6], 0
      %s30 = sshll.u32 %s1, 4
      %s31 = int_to_ptr.hbm [resolvable:$true] %s30
      %s32 = sshll.u32 [#allocation5], 4
      %s33 = int_to_ptr.vmem [resolvable:$true] %s32
      %35 = dma.hbm_to_vmem [thread:$0]  %s31, 16, %s33, [#allocation6]
    $region9: #{tpu_custom_call.1} parent=1 // pred_fallthru
      _
    // Predicated region
    $region10: #{tpu_custom_call.1} parent=1 // pred_check
      _
    $region11: #{tpu_custom_call.1} parent=1 // pred_check_branch
      %37 = sbr.rel (0) target = $region13
    $region12: #{tpu_custom_call.1} parent=1 // pred_region
      _
    $region13: #{tpu_custom_call.1} parent=1 // pred_fallthru
      _
    // Predicated region
    $region14: #{tpu_custom_call.1} parent=1 // pred_check
      _
    $region15: #{tpu_custom_call.1} parent=1 // pred_check_branch
      %39 = sbr.rel (0) target = $region17
    $region16: #{tpu_custom_call.1} parent=1 // pred_region
      _
    $region17: #{tpu_custom_call.1} parent=1 // pred_fallthru
      _
    // Predicated region
    $region18: #{tpu_custom_call.1} parent=1 // pred_check
      _
    $region19: #{tpu_custom_call.1} parent=1 // pred_check_branch
      %41 = sbr.rel (0) target = $region21
    $region20: #{tpu_custom_call.1} parent=1 // pred_region
      %43 = dma.done [#allocation3], 256
    $region21: #{tpu_custom_call.1} parent=1 // pred_fallthru
      _
    // Predicated region
    $region22: #{tpu_custom_call.1} parent=1 // pred_check
      _
    $region23: #{tpu_custom_call.1} parent=1 // pred_check_branch
      %45 = sbr.rel (0) target = $region25
    $region24: #{tpu_custom_call.1} parent=1 // pred_region
      %47 = dma.done [#allocation6], 16
    $region25: #{tpu_custom_call.1} parent=1 // pred_fallthru
      _
    %v48 = vld [vmem:[#allocation5] sm:$0x1]
    %vm49 = vcmask 253952
    %v50 = vsel %vm49, %v48, 0.0
    %51 = vadd.xlane.f32.xlu0 %v50
    %v52 = vpop.xlane.xlu0 %51
    %v53 = vld [vmem:[%s2] sm:$0x1]
    %v54 = vld [vmem:[%s3] sm:$0x1]
    %v55 = vld [vmem:[#allocation2] sm:$0xff]
    %v56 = vld [vmem:[#allocation2 + $0x8] sm:$0xff]
    %vm57 = vcmask 261120
    %v58 = vsel %vm57, %v55, 0.0
    %59 = vadd.xlane.f32.xlu0 %v58
    %v60 = vpop.xlane.xlu0 %59
    %v61 = vsel %vm57, %v56, 0.0
    %62 = vadd.xlane.f32.xlu0 %v61
    %v63 = vpop.xlane.xlu0 %62
    %v64 = vmul.f32 %v55, %v55
    %v65 = vmul.f32 %v56, %v56
    %v66 = vsel %vm57, %v64, 0.0
    %67 = vadd.xlane.f32.xlu0 %v66
    %v68 = vpop.xlane.xlu0 %67
    %v69 = vsel %vm57, %v65, 0.0
    %70 = vadd.xlane.f32.xlu0 %v69
    %v71 = vpop.xlane.xlu0 %70
    %v73 = vperm.slane %v48, 0
    %v75 = vmul.f32 %v55, %v73
    %v76 = vmul.f32 %v56, %v73
    %v77 = vsel %vm57, %v75, 0.0
    %78 = vadd.xlane.f32.xlu0 %v77
    %v79 = vpop.xlane.xlu0 %78
    %v80 = vsel %vm57, %v76, 0.0
    %81 = vadd.xlane.f32.xlu0 %v80
    %v82 = vpop.xlane.xlu0 %81
    %v83 = vmul.f32 %v60, 0.03125
    %v84 = vmul.f32 %v63, 0.03125
    %v85 = vmul.f32 %v68, 0.03125
    %v86 = vmul.f32 %v71, 0.03125
    %v87 = vmul.f32 %v83, %v83
    %v88 = vmul.f32 %v84, %v84
    %v89 = vsub.f32 %v85, %v87
    %v90 = vsub.f32 %v86, %v88
    %v91 = vmax.f32 %v89, 0.0
    %v92 = vmax.f32 %v90, 0.0
    %v93 = vadd.f32 %v91, 1e-05
    %v94 = vadd.f32 %v92, 1e-05
    %v95 = vrsqrt.pop %v93
    %v96 = vmul.f32 %v95, %v93
    %v97 = vmul.f32 %v96, %v95
    %v98 = vmul.f32 0.5, %v97
    %v99 = vsub.f32 1.5, %v98
    %v100 = vmul.f32 %v95, %v99
    %vm101 = vweird.f32 %v93
    %vm102 = vweird.f32 %v95
    %vm103 = vmor %vm101, %vm102
    %v104 = vsel %vm103, %v95, %v100
    %v105 = vrsqrt.pop %v94
    %v106 = vmul.f32 %v105, %v94
    %v107 = vmul.f32 %v106, %v105
    %v108 = vmul.f32 0.5, %v107
    %v109 = vsub.f32 1.5, %v108
    %v110 = vmul.f32 %v105, %v109
    %vm111 = vweird.f32 %v94
    %vm112 = vweird.f32 %v105
    %vm113 = vmor %vm111, %vm112
    %v114 = vsel %vm113, %v105, %v110
    %v115 = vperm.slane %v52, 0
    %v116 = vmul.f32 %v83, %v115
    %v117 = vmul.f32 %v84, %v115
    %v118 = vsub.f32 %v79, %v116
    %v119 = vsub.f32 %v82, %v117
    %v120 = vmul.f32 %v104, %v118
    %v121 = vmul.f32 %v114, %v119
    %v124 = vlaneseq
    %v125 = vand.u32 %v124, 127
    %v126 = vperm.slane %v120, %v125
    %v127 = vperm.slane %v121, %v125
    %vm128 = vcmask 1041409
    %v129 = vsel %vm128, %v127, %v126
    %vm131 = vcmask 58368
    %v132 = vsel %vm131, %v129, -inf
    %133 = vmax.xlane.f32.xlu0 %v132
    %v134 = vpop.xlane.xlu0 %133
    %v136 = vperm.slane %v134, 0
    %v137 = vperm.slane %v134, 1
    %v140 = vsub.f32 %v120, %v136
    %v141 = vsub.f32 %v121, %v137
    %v142 = vmax.f32 %v140, -10.0
    %v143 = vmax.f32 %v141, -10.0
    %v144 = vmul.f32 %v142, 1.442695
    %v145 = vpow.pop %v144
    %v146 = vmul.f32 %v143, 1.442695
    %v147 = vpow.pop %v146
    %150 = vset.pattern.permute.xlu0 0
    %151 = vperm.xlu0 %150, %v145
    %v152 = vpop.permute.xlu0 %151
    %153 = vset.pattern.permute.xlu0 0
    %154 = vperm.xlu0 %153, %v147
    %v155 = vpop.permute.xlu0 %154
    %v156 = vperm.slane %v152, %v125
    %v157 = vperm.slane %v155, %v125
    %v158 = vsel %vm128, %v157, %v156
    %v160 = vsel %vm131, %v158, 0.0
    %161 = vadd.xlane.f32.xlu0 %v160
    %v162 = vpop.xlane.xlu0 %161
    %v163 = vmul.f32 %v145, %v104
    %v164 = vmul.f32 %v147, %v114
    %v165 = vmul.f32 %v163, %v83
    %v166 = vmul.f32 %v164, %v84
    %169 = vset.pattern.permute.xlu0 0
    %170 = vperm.xlu0 %169, %v165
    %v171 = vpop.permute.xlu0 %170
    %172 = vset.pattern.permute.xlu0 0
    %173 = vperm.xlu0 %172, %v166
    %v174 = vpop.permute.xlu0 %173
    %v175 = vperm.slane %v171, %v125
    %v176 = vperm.slane %v174, %v125
    %v177 = vsel %vm128, %v176, %v175
    %v179 = vsel %vm131, %v177, 0.0
    %180 = vadd.xlane.f32.xlu0 %v179
    %v181 = vpop.xlane.xlu0 %180
    %183 = vset.pattern.permute.xlu0 0
    %184 = vperm.xlu0 %183, %v163
    %v185 = vpop.permute.xlu0 %184
    %188 = vset.pattern.permute.xlu0 0
    %189 = vperm.xlu0 %188, %v164
    %v190 = vpop.permute.xlu0 %189
    %v192 = vmul.f32 %v185, %v55
    %v193 = vmul.f32 %v190, %v56
    %v194 = vsel %vm57, %v192, 0.0
    %v195 = vrot.slane %v194, 4
    %v196 = vadd.f32 %v194, %v195
    %v197 = vrot.slane %v196, 2
    %v198 = vadd.f32 %v196, %v197
    %v199 = vrot.slane %v198, 1
    %v200 = vadd.f32 %v198, %v199
    %v201 = vsel %vm57, %v193, 0.0
    %v202 = vrot.slane %v201, 4
    %v203 = vadd.f32 %v201, %v202
    %v204 = vrot.slane %v203, 2
    %v205 = vadd.f32 %v203, %v204
    %v206 = vrot.slane %v205, 1
    %v207 = vadd.f32 %v205, %v206
    %v208 = vrcp.pop %v162
    %v210 = vrot.slane %v181, 1
    %v213 = vsub.f32 %v200, %v181
    %v214 = vsub.f32 %v207, %v210
    %v216 = vrot.slane %v208, 1
    %v219 = vmul.f32 %v213, %v208
    %v220 = vmul.f32 %v214, %v216
    %v222 = vperm.slane %v53, 0
    %v226 = vrot.slane %v220, 7
    %v227 = vsel %vm128, %v226, %v219
    %v229 = vmul.f32 %v222, %v227
    %v231 = vperm.slane %v54, 0
    %v233 = vadd.f32 %v229, %v231
    %vm234 = vcmask 254976
    %235 = vst.msk [vmem:[#allocation7] sm:$0x3] %vm234, %v233
    // Predicated region
    $region26: #{tpu_custom_call.1} parent=1 // pred_check
      _
    $region27: #{tpu_custom_call.1} parent=1 // pred_check_branch
      %237 = sbr.rel (0) target = $region29
    $region28: #{tpu_custom_call.1} parent=1 // pred_region
      %239 = vsyncadd [#allocation4], 0
      %s241 = sshll.u32 [#allocation7], 4
      %s242 = int_to_ptr.vmem [resolvable:$true] %s241
      %s243 = sshll.u32 %s4, 4
      %s244 = int_to_ptr.hbm [resolvable:$true] %s243
      %246 = dma.vmem_to_hbm [thread:$0]  %s242, 32, %s244, [#allocation4]
    $region29: #{tpu_custom_call.1} parent=1 // pred_fallthru
      _
    // Predicated region
    $region30: #{tpu_custom_call.1} parent=1 // pred_check
      _
    $region31: #{tpu_custom_call.1} parent=1 // pred_check_branch
      %248 = sbr.rel (0) target = $region33
    $region32: #{tpu_custom_call.1} parent=1 // pred_region
      %250 = dma.done [#allocation4], 32
    $region33: #{tpu_custom_call.1} parent=1 // pred_fallthru
      _
    %251 = vsyncpa [#allocation3], 1
    %252 = vsyncpa [#allocation6], 1
    %253 = vsyncpa [#allocation4], 1

</llo_original>
